<compile_context>
chip_gen: v7x
topology: tpu7x:2x2x1
jax: 0.10.0
libtpu: 0.0.40
codegen_flags: <defaults>
</compile_context>

<pallas_src>
import jax
import jax.numpy as jnp
import numpy as np
from jax import lax
from jax.experimental import pallas as pl
from jax.experimental.pallas import tpu as pltpu


_TOKEN_BLOCK = 128   # tokens per grid step -> (128, 128) lane/sublane-dense output blocks
_UNROLL = 8          # partial unroll of the in-block gather loop (LLO scheduling slack)


def _embedding_gather_kernel(wid_ref, p1id_ref, p2id_ref,      # SMEM (N_pad,) int32 ids
                             wtab_ref, p1tab_ref, p2tab_ref,   # VMEM (Vw,Dp128),(Vp,Dp128),(Vp,Dp128)
                             out_ref):                         # VMEM (TB, Dp128)
    tb = out_ref.shape[0]
    base = pl.program_id(0) * tb

    def body(j, carry):
        i0 = j * _UNROLL
        for u in range(_UNROLL):                 # trace-time unroll
            i = i0 + u
            g = base + i
            # Three dynamic-sublane row gathers from the VMEM-resident tables.
            # Tables are column-disjoint & zero-padded, so "+" == concat+pad.
            row = (wtab_ref[pl.ds(wid_ref[g], 1), :]
                   + p1tab_ref[pl.ds(p1id_ref[g], 1), :]
                   + p2tab_ref[pl.ds(p2id_ref[g], 1), :])
            out_ref[pl.ds(i, 1), :] = row        # lane-dense (1, 128) row store
        return carry

    lax.fori_loop(0, tb // _UNROLL, body, 0)


def embedding_forward(word, pos1, pos2, word_table, pos1_table, pos2_table):
    B, L = word.shape
    N = B * L
    Vw, Dw = word_table.shape
    Vp, Dp = pos1_table.shape
    assert pos2_table.shape == (Vp, Dp)
    D = Dw + 2 * Dp
    D_pad = max(128, ((D + 127) // 128) * 128)          # lane-pad fused feature dim
    TB = _TOKEN_BLOCK
    N_pad = ((N + TB - 1) // TB) * TB                   # pad token count to block multiple

    # Flatten, clamp (no bounds check on dynamic VMEM loads), pad to N_pad.
    def prep_ids(ids, vmax):
        ids = jnp.clip(ids.reshape(N).astype(jnp.int32), 0, vmax - 1)
        return jnp.pad(ids, (0, N_pad - N))
    wids = prep_ids(word, Vw)
    p1ids = prep_ids(pos1, Vp)
    p2ids = prep_ids(pos2, Vp)

    # Column-placed, zero-padded tables: concat becomes a sum of gathered rows.
    wtab = jnp.zeros((Vw, D_pad), jnp.float32).at[:, :Dw].set(
        word_table.astype(jnp.float32))
    p1tab = jnp.zeros((Vp, D_pad), jnp.float32).at[:, Dw:Dw + Dp].set(
        pos1_table.astype(jnp.float32))
    p2tab = jnp.zeros((Vp, D_pad), jnp.float32).at[:, Dw + Dp:D].set(
        pos2_table.astype(jnp.float32))

    grid_spec = pltpu.PrefetchScalarGridSpec(
        num_scalar_prefetch=3,                 # wids / p1ids / p2ids -> SMEM
        grid=(N_pad // TB,),
        in_specs=[
            # Full tables, constant block index -> DMA'd to VMEM once, then resident.
            pl.BlockSpec((Vw, D_pad), lambda i, w, p1, p2: (0, 0)),
            pl.BlockSpec((Vp, D_pad), lambda i, w, p1, p2: (0, 0)),
            pl.BlockSpec((Vp, D_pad), lambda i, w, p1, p2: (0, 0)),
        ],
        out_specs=pl.BlockSpec((TB, D_pad), lambda i, w, p1, p2: (i, 0)),
    )

    out = pl.pallas_call(
        _embedding_gather_kernel,
        out_shape=jax.ShapeDtypeStruct((N_pad, D_pad), jnp.float32),
        grid_spec=grid_spec,
        compiler_params=pltpu.CompilerParams(
            dimension_semantics=("parallel",)),   # shard token blocks across TCs (v7x)
    )(wids, p1ids, p2ids, wtab, p1tab, p2tab)

    # Drop token + lane padding, restore [B, L, Dw + 2*Dp].
    return out[:N, :D].reshape(B, L, D)


def _build_params(key, num_words, max_length, word_dim, pos_dim):
    k1, k2, k3 = jax.random.split(key, 3)
    # word_vec_mat (pretrained vectors) + unk row + blk row (both zeros)
    word_vec_mat = jax.random.normal(k1, (num_words, word_dim), jnp.float32)
    unk = jnp.zeros((1, word_dim), jnp.float32)
    blk = jnp.zeros((1, word_dim), jnp.float32)
    word_table = jnp.concatenate([word_vec_mat, unk, blk], axis=0)  # [num_words+2, Dw]

    # nn.Embedding(2*max_length, pos_dim, padding_idx=0): N(0,1) init, row 0 zeroed
    pos1_table = jax.random.normal(k2, (2 * max_length, pos_dim), jnp.float32)
    pos1_table = pos1_table.at[0].set(0.0)
    pos2_table = jax.random.normal(k3, (2 * max_length, pos_dim), jnp.float32)
    pos2_table = pos2_table.at[0].set(0.0)
    return word_table, pos1_table, pos2_table


if __name__ == "__main__":
    key = jax.random.PRNGKey(0)
    kp, kw, k1, k2 = jax.random.split(key, 4)

    # small, module-consistent shapes
    num_words = 100
    max_length = 16          # sequence length / max_length
    word_dim = 50
    pos_dim = 5
    B = 2

    word_table, pos1_table, pos2_table = _build_params(
        kp, num_words, max_length, word_dim, pos_dim)

    word = jax.random.randint(kw, (B, max_length), 0, num_words + 2, jnp.int32)
    pos1 = jax.random.randint(k1, (B, max_length), 0, 2 * max_length, jnp.int32)
    pos2 = jax.random.randint(k2, (B, max_length), 0, 2 * max_length, jnp.int32)

    out = embedding_forward(word, pos1, pos2, word_table, pos1_table, pos2_table)
    out = jax.block_until_ready(out)

    # pure-JAX reference (mirrors torch.cat of the three nn.Embedding lookups)
    ref = jnp.concatenate(
        [jnp.take(word_table, word, axis=0),
         jnp.take(pos1_table, pos1, axis=0),
         jnp.take(pos2_table, pos2, axis=0)], axis=2)

    assert out.shape == (B, max_length, word_dim + 2 * pos_dim), out.shape
    np.testing.assert_allclose(np.asarray(out), np.asarray(ref), rtol=1e-5, atol=1e-5)
    print("KERNEL_OK")
</pallas_src>

<mosaic_0001>
module attributes {stable_mosaic.version = 11 : i64} {
  func.func @_embedding_gather_kernel(%arg0: i32, %arg1: memref<128xi32, #tpu.memory_space<smem>>, %arg2: memref<128xi32, #tpu.memory_space<smem>>, %arg3: memref<128xi32, #tpu.memory_space<smem>>, %arg4: memref<102x128xf32, #tpu.memory_space<vmem>>, %arg5: memref<32x128xf32, #tpu.memory_space<vmem>>, %arg6: memref<32x128xf32, #tpu.memory_space<vmem>>, %arg7: memref<128x128xf32, #tpu.memory_space<vmem>>) attributes {dimension_semantics = [#tpu.dimension_semantics<parallel>], iteration_bounds = array<i64: 1>, scalar_prefetch = 3 : i64, scratch_operands = 0 : i64, tpu.core_type = #tpu.core_type<tc>, window_params = [{pipeline_mode = #tpu.pipeline_mode<synchronous>, transform_indices = @transform_0, window_bounds = array<i64: 102, 128>}, {pipeline_mode = #tpu.pipeline_mode<synchronous>, transform_indices = @transform_1, window_bounds = array<i64: 32, 128>}, {pipeline_mode = #tpu.pipeline_mode<synchronous>, transform_indices = @transform_2, window_bounds = array<i64: 32, 128>}, {transform_indices = @transform_3, window_bounds = array<i64: 128, 128>}]} {
    %c128_i32 = arith.constant 128 : i32
    %0 = arith.muli %arg0, %c128_i32 : i32
    %c0_i32 = arith.constant 0 : i32
    %c16_i32 = arith.constant 16 : i32
    %1 = arith.addi %c0_i32, %c16_i32 : i32
    %c1_i32 = arith.constant 1 : i32
    scf.for %arg8 = %c0_i32 to %1 step %c1_i32  : i32 {
      %c8_i32 = arith.constant 8 : i32
      %2 = arith.muli %arg8, %c8_i32 : i32
      %c0_i32_1 = arith.constant 0 : i32
      %3 = arith.addi %2, %c0_i32_1 : i32
      %4 = arith.addi %0, %3 : i32
      %5 = arith.index_cast %4 : i32 to index
      %6 = memref.load %arg1[%5] : memref<128xi32, #tpu.memory_space<smem>>
      %7 = arith.index_cast %6 : i32 to index
      %c0 = arith.constant 0 : index
      %8 = vector.load %arg4[%7, %c0] : memref<102x128xf32, #tpu.memory_space<vmem>>, vector<1x128xf32>
      %9 = arith.index_cast %4 : i32 to index
      %10 = memref.load %arg2[%9] : memref<128xi32, #tpu.memory_space<smem>>
      %11 = arith.index_cast %10 : i32 to index
      %c0_2 = arith.constant 0 : index
      %12 = vector.load %arg5[%11, %c0_2] : memref<32x128xf32, #tpu.memory_space<vmem>>, vector<1x128xf32>
      %13 = arith.addf %8, %12 : vector<1x128xf32>
      %14 = arith.index_cast %4 : i32 to index
      %15 = memref.load %arg3[%14] : memref<128xi32, #tpu.memory_space<smem>>
      %16 = arith.index_cast %15 : i32 to index
      %c0_3 = arith.constant 0 : index
      %17 = vector.load %arg6[%16, %c0_3] : memref<32x128xf32, #tpu.memory_space<vmem>>, vector<1x128xf32>
      %18 = arith.addf %13, %17 : vector<1x128xf32>
      %19 = arith.index_cast %3 : i32 to index
      %c0_4 = arith.constant 0 : index
      %20 = vector.load %arg7[%19, %c0_4] : memref<128x128xf32, #tpu.memory_space<vmem>>, vector<1x128xf32>
      tpu.vector_store %arg7[%19, %c0_4], %18 {strides = array<i32>} : memref<128x128xf32, #tpu.memory_space<vmem>>, vector<1x128xf32>,
      %c1_i32_5 = arith.constant 1 : i32
      %21 = arith.addi %2, %c1_i32_5 : i32
      %22 = arith.addi %0, %21 : i32
      %23 = arith.index_cast %22 : i32 to index
      %24 = memref.load %arg1[%23] : memref<128xi32, #tpu.memory_space<smem>>
      %25 = arith.index_cast %24 : i32 to index
      %c0_6 = arith.constant 0 : index
      %26 = vector.load %arg4[%25, %c0_6] : memref<102x128xf32, #tpu.memory_space<vmem>>, vector<1x128xf32>
      %27 = arith.index_cast %22 : i32 to index
      %28 = memref.load %arg2[%27] : memref<128xi32, #tpu.memory_space<smem>>
      %29 = arith.index_cast %28 : i32 to index
      %c0_7 = arith.constant 0 : index
      %30 = vector.load %arg5[%29, %c0_7] : memref<32x128xf32, #tpu.memory_space<vmem>>, vector<1x128xf32>
      %31 = arith.addf %26, %30 : vector<1x128xf32>
      %32 = arith.index_cast %22 : i32 to index
      %33 = memref.load %arg3[%32] : memref<128xi32, #tpu.memory_space<smem>>
      %34 = arith.index_cast %33 : i32 to index
      %c0_8 = arith.constant 0 : index
      %35 = vector.load %arg6[%34, %c0_8] : memref<32x128xf32, #tpu.memory_space<vmem>>, vector<1x128xf32>
      %36 = arith.addf %31, %35 : vector<1x128xf32>
      %37 = arith.index_cast %21 : i32 to index
      %c0_9 = arith.constant 0 : index
      %38 = vector.load %arg7[%37, %c0_9] : memref<128x128xf32, #tpu.memory_space<vmem>>, vector<1x128xf32>
      tpu.vector_store %arg7[%37, %c0_9], %36 {strides = array<i32>} : memref<128x128xf32, #tpu.memory_space<vmem>>, vector<1x128xf32>,
      %c2_i32 = arith.constant 2 : i32
      %39 = arith.addi %2, %c2_i32 : i32
      %40 = arith.addi %0, %39 : i32
      %41 = arith.index_cast %40 : i32 to index
      %42 = memref.load %arg1[%41] : memref<128xi32, #tpu.memory_space<smem>>
      %43 = arith.index_cast %42 : i32 to index
      %c0_10 = arith.constant 0 : index
      %44 = vector.load %arg4[%43, %c0_10] : memref<102x128xf32, #tpu.memory_space<vmem>>, vector<1x128xf32>
      %45 = arith.index_cast %40 : i32 to index
      %46 = memref.load %arg2[%45] : memref<128xi32, #tpu.memory_space<smem>>
      %47 = arith.index_cast %46 : i32 to index
      %c0_11 = arith.constant 0 : index
      %48 = vector.load %arg5[%47, %c0_11] : memref<32x128xf32, #tpu.memory_space<vmem>>, vector<1x128xf32>
      %49 = arith.addf %44, %48 : vector<1x128xf32>
      %50 = arith.index_cast %40 : i32 to index
      %51 = memref.load %arg3[%50] : memref<128xi32, #tpu.memory_space<smem>>
      %52 = arith.index_cast %51 : i32 to index
      %c0_12 = arith.constant 0 : index
      %53 = vector.load %arg6[%52, %c0_12] : memref<32x128xf32, #tpu.memory_space<vmem>>, vector<1x128xf32>
      %54 = arith.addf %49, %53 : vector<1x128xf32>
      %55 = arith.index_cast %39 : i32 to index
      %c0_13 = arith.constant 0 : index
      %56 = vector.load %arg7[%55, %c0_13] : memref<128x128xf32, #tpu.memory_space<vmem>>, vector<1x128xf32>
      tpu.vector_store %arg7[%55, %c0_13], %54 {strides = array<i32>} : memref<128x128xf32, #tpu.memory_space<vmem>>, vector<1x128xf32>,
      %c3_i32 = arith.constant 3 : i32
      %57 = arith.addi %2, %c3_i32 : i32
      %58 = arith.addi %0, %57 : i32
      %59 = arith.index_cast %58 : i32 to index
      %60 = memref.load %arg1[%59] : memref<128xi32, #tpu.memory_space<smem>>
      %61 = arith.index_cast %60 : i32 to index
      %c0_14 = arith.constant 0 : index
      %62 = vector.load %arg4[%61, %c0_14] : memref<102x128xf32, #tpu.memory_space<vmem>>, vector<1x128xf32>
      %63 = arith.index_cast %58 : i32 to index
      %64 = memref.load %arg2[%63] : memref<128xi32, #tpu.memory_space<smem>>
      %65 = arith.index_cast %64 : i32 to index
      %c0_15 = arith.constant 0 : index
      %66 = vector.load %arg5[%65, %c0_15] : memref<32x128xf32, #tpu.memory_space<vmem>>, vector<1x128xf32>
      %67 = arith.addf %62, %66 : vector<1x128xf32>
      %68 = arith.index_cast %58 : i32 to index
      %69 = memref.load %arg3[%68] : memref<128xi32, #tpu.memory_space<smem>>
      %70 = arith.index_cast %69 : i32 to index
      %c0_16 = arith.constant 0 : index
      %71 = vector.load %arg6[%70, %c0_16] : memref<32x128xf32, #tpu.memory_space<vmem>>, vector<1x128xf32>
      %72 = arith.addf %67, %71 : vector<1x128xf32>
      %73 = arith.index_cast %57 : i32 to index
      %c0_17 = arith.constant 0 : index
      %74 = vector.load %arg7[%73, %c0_17] : memref<128x128xf32, #tpu.memory_space<vmem>>, vector<1x128xf32>
      tpu.vector_store %arg7[%73, %c0_17], %72 {strides = array<i32>} : memref<128x128xf32, #tpu.memory_space<vmem>>, vector<1x128xf32>,
      %c4_i32 = arith.constant 4 : i32
      %75 = arith.addi %2, %c4_i32 : i32
      %76 = arith.addi %0, %75 : i32
      %77 = arith.index_cast %76 : i32 to index
      %78 = memref.load %arg1[%77] : memref<128xi32, #tpu.memory_space<smem>>
      %79 = arith.index_cast %78 : i32 to index
      %c0_18 = arith.constant 0 : index
      %80 = vector.load %arg4[%79, %c0_18] : memref<102x128xf32, #tpu.memory_space<vmem>>, vector<1x128xf32>
      %81 = arith.index_cast %76 : i32 to index
      %82 = memref.load %arg2[%81] : memref<128xi32, #tpu.memory_space<smem>>
      %83 = arith.index_cast %82 : i32 to index
      %c0_19 = arith.constant 0 : index
      %84 = vector.load %arg5[%83, %c0_19] : memref<32x128xf32, #tpu.memory_space<vmem>>, vector<1x128xf32>
      %85 = arith.addf %80, %84 : vector<1x128xf32>
      %86 = arith.index_cast %76 : i32 to index
      %87 = memref.load %arg3[%86] : memref<128xi32, #tpu.memory_space<smem>>
      %88 = arith.index_cast %87 : i32 to index
      %c0_20 = arith.constant 0 : index
      %89 = vector.load %arg6[%88, %c0_20] : memref<32x128xf32, #tpu.memory_space<vmem>>, vector<1x128xf32>
      %90 = arith.addf %85, %89 : vector<1x128xf32>
      %91 = arith.index_cast %75 : i32 to index
      %c0_21 = arith.constant 0 : index
      %92 = vector.load %arg7[%91, %c0_21] : memref<128x128xf32, #tpu.memory_space<vmem>>, vector<1x128xf32>
      tpu.vector_store %arg7[%91, %c0_21], %90 {strides = array<i32>} : memref<128x128xf32, #tpu.memory_space<vmem>>, vector<1x128xf32>,
      %c5_i32 = arith.constant 5 : i32
      %93 = arith.addi %2, %c5_i32 : i32
      %94 = arith.addi %0, %93 : i32
      %95 = arith.index_cast %94 : i32 to index
      %96 = memref.load %arg1[%95] : memref<128xi32, #tpu.memory_space<smem>>
      %97 = arith.index_cast %96 : i32 to index
      %c0_22 = arith.constant 0 : index
      %98 = vector.load %arg4[%97, %c0_22] : memref<102x128xf32, #tpu.memory_space<vmem>>, vector<1x128xf32>
      %99 = arith.index_cast %94 : i32 to index
      %100 = memref.load %arg2[%99] : memref<128xi32, #tpu.memory_space<smem>>
      %101 = arith.index_cast %100 : i32 to index
      %c0_23 = arith.constant 0 : index
      %102 = vector.load %arg5[%101, %c0_23] : memref<32x128xf32, #tpu.memory_space<vmem>>, vector<1x128xf32>
      %103 = arith.addf %98, %102 : vector<1x128xf32>
      %104 = arith.index_cast %94 : i32 to index
      %105 = memref.load %arg3[%104] : memref<128xi32, #tpu.memory_space<smem>>
      %106 = arith.index_cast %105 : i32 to index
      %c0_24 = arith.constant 0 : index
      %107 = vector.load %arg6[%106, %c0_24] : memref<32x128xf32, #tpu.memory_space<vmem>>, vector<1x128xf32>
      %108 = arith.addf %103, %107 : vector<1x128xf32>
      %109 = arith.index_cast %93 : i32 to index
      %c0_25 = arith.constant 0 : index
      %110 = vector.load %arg7[%109, %c0_25] : memref<128x128xf32, #tpu.memory_space<vmem>>, vector<1x128xf32>
      tpu.vector_store %arg7[%109, %c0_25], %108 {strides = array<i32>} : memref<128x128xf32, #tpu.memory_space<vmem>>, vector<1x128xf32>,
      %c6_i32 = arith.constant 6 : i32
      %111 = arith.addi %2, %c6_i32 : i32
      %112 = arith.addi %0, %111 : i32
      %113 = arith.index_cast %112 : i32 to index
      %114 = memref.load %arg1[%113] : memref<128xi32, #tpu.memory_space<smem>>
      %115 = arith.index_cast %114 : i32 to index
      %c0_26 = arith.constant 0 : index
      %116 = vector.load %arg4[%115, %c0_26] : memref<102x128xf32, #tpu.memory_space<vmem>>, vector<1x128xf32>
      %117 = arith.index_cast %112 : i32 to index
      %118 = memref.load %arg2[%117] : memref<128xi32, #tpu.memory_space<smem>>
      %119 = arith.index_cast %118 : i32 to index
      %c0_27 = arith.constant 0 : index
      %120 = vector.load %arg5[%119, %c0_27] : memref<32x128xf32, #tpu.memory_space<vmem>>, vector<1x128xf32>
      %121 = arith.addf %116, %120 : vector<1x128xf32>
      %122 = arith.index_cast %112 : i32 to index
      %123 = memref.load %arg3[%122] : memref<128xi32, #tpu.memory_space<smem>>
      %124 = arith.index_cast %123 : i32 to index
      %c0_28 = arith.constant 0 : index
      %125 = vector.load %arg6[%124, %c0_28] : memref<32x128xf32, #tpu.memory_space<vmem>>, vector<1x128xf32>
      %126 = arith.addf %121, %125 : vector<1x128xf32>
      %127 = arith.index_cast %111 : i32 to index
      %c0_29 = arith.constant 0 : index
      %128 = vector.load %arg7[%127, %c0_29] : memref<128x128xf32, #tpu.memory_space<vmem>>, vector<1x128xf32>
      tpu.vector_store %arg7[%127, %c0_29], %126 {strides = array<i32>} : memref<128x128xf32, #tpu.memory_space<vmem>>, vector<1x128xf32>,
      %c7_i32 = arith.constant 7 : i32
      %129 = arith.addi %2, %c7_i32 : i32
      %130 = arith.addi %0, %129 : i32
      %131 = arith.index_cast %130 : i32 to index
      %132 = memref.load %arg1[%131] : memref<128xi32, #tpu.memory_space<smem>>
      %133 = arith.index_cast %132 : i32 to index
      %c0_30 = arith.constant 0 : index
      %134 = vector.load %arg4[%133, %c0_30] : memref<102x128xf32, #tpu.memory_space<vmem>>, vector<1x128xf32>
      %135 = arith.index_cast %130 : i32 to index
      %136 = memref.load %arg2[%135] : memref<128xi32, #tpu.memory_space<smem>>
      %137 = arith.index_cast %136 : i32 to index
      %c0_31 = arith.constant 0 : index
      %138 = vector.load %arg5[%137, %c0_31] : memref<32x128xf32, #tpu.memory_space<vmem>>, vector<1x128xf32>
      %139 = arith.addf %134, %138 : vector<1x128xf32>
      %140 = arith.index_cast %130 : i32 to index
      %141 = memref.load %arg3[%140] : memref<128xi32, #tpu.memory_space<smem>>
      %142 = arith.index_cast %141 : i32 to index
      %c0_32 = arith.constant 0 : index
      %143 = vector.load %arg6[%142, %c0_32] : memref<32x128xf32, #tpu.memory_space<vmem>>, vector<1x128xf32>
      %144 = arith.addf %139, %143 : vector<1x128xf32>
      %145 = arith.index_cast %129 : i32 to index
      %c0_33 = arith.constant 0 : index
      %146 = vector.load %arg7[%145, %c0_33] : memref<128x128xf32, #tpu.memory_space<vmem>>, vector<1x128xf32>
      tpu.vector_store %arg7[%145, %c0_33], %144 {strides = array<i32>} : memref<128x128xf32, #tpu.memory_space<vmem>>, vector<1x128xf32>,
    }
    %c16_i32_0 = arith.constant 16 : i32
    return
  }
  func.func @transform_0(%arg0: i32, %arg1: memref<128xi32, #tpu.memory_space<smem>>, %arg2: memref<128xi32, #tpu.memory_space<smem>>, %arg3: memref<128xi32, #tpu.memory_space<smem>>) -> (i32, i32) {
    %c0_i32 = arith.constant 0 : i32
    %c0_i32_0 = arith.constant 0 : i32
    %c0_i32_1 = arith.constant 0 : i32
    return %c0_i32, %c0_i32_0 : i32, i32
  }
  func.func @transform_1(%arg0: i32, %arg1: memref<128xi32, #tpu.memory_space<smem>>, %arg2: memref<128xi32, #tpu.memory_space<smem>>, %arg3: memref<128xi32, #tpu.memory_space<smem>>) -> (i32, i32) {
    %c0_i32 = arith.constant 0 : i32
    %c0_i32_0 = arith.constant 0 : i32
    %c0_i32_1 = arith.constant 0 : i32
    return %c0_i32, %c0_i32_0 : i32, i32
  }
  func.func @transform_2(%arg0: i32, %arg1: memref<128xi32, #tpu.memory_space<smem>>, %arg2: memref<128xi32, #tpu.memory_space<smem>>, %arg3: memref<128xi32, #tpu.memory_space<smem>>) -> (i32, i32) {
    %c0_i32 = arith.constant 0 : i32
    %c0_i32_0 = arith.constant 0 : i32
    %c0_i32_1 = arith.constant 0 : i32
    return %c0_i32, %c0_i32_0 : i32, i32
  }
  func.func @transform_3(%arg0: i32, %arg1: memref<128xi32, #tpu.memory_space<smem>>, %arg2: memref<128xi32, #tpu.memory_space<smem>>, %arg3: memref<128xi32, #tpu.memory_space<smem>>) -> (i32, i32) {
    %c0_i32 = arith.constant 0 : i32
    %c0_i32_0 = arith.constant 0 : i32
    return %arg0, %c0_i32 : i32, i32
  }
}

</mosaic_0001>

<llo_original>
// kernel: tpu_custom_call.1
$region0: #{tpu_custom_call.1}
  #allocation0 [shape = 'u32[]', space=smem, size = 0x4, offset = 0x4, fixed_abs, tag = 'smem constant byte address 0x4 - core index']
  #allocation1 [shape = 'u32[144,128]{1,0:T(1,128)}', space=vmem, size = 0x12000, scoped, tag = 'internal scratch']
  #allocation2 [shape = 's32[1]{0}', space=sflag, size = 0x4, scoped, tag = 'scoped memory for tpu_custom_call.1']
  #allocation3 [shape = 'u8[512]{0}', space=smem, size = 0x200, scoped, tag = 'prefetched SMEM operand 0']
  #allocation4 [shape = 'u8[512]{0}', space=smem, size = 0x200, scoped, tag = 'prefetched SMEM operand 1']
  #allocation5 [shape = 'u8[512]{0}', space=smem, size = 0x200, scoped, tag = 'prefetched SMEM operand 2']
  %s0 = inlined_call_operand.hbm [shape: s32[128], index: 0, kind: input, shape index: {}]
  %s1 = inlined_call_operand.vmem [shape: s32[128], index: 1, kind: input, shape index: {}]
  %s2 = inlined_call_operand.vmem [shape: s32[128], index: 2, kind: input, shape index: {}]
  %s3 = inlined_call_operand.hbm [shape: f32[102,128], index: 3, kind: input, shape index: {}]
  %s4 = inlined_call_operand.hbm [shape: f32[32,128], index: 4, kind: input, shape index: {}]
  %s5 = inlined_call_operand.hbm [shape: f32[32,128], index: 5, kind: input, shape index: {}]
  %s6 = inlined_call_operand.hbm [shape: f32[128,128], index: 6, kind: output, shape index: {}]
  %s7 = sld [smem:[#allocation0]]
  $region41: #{tpu_custom_call.1} parent=0
    _
  %s9 = ssub.s32 1, %s7
  %s10 = scalar_select 0, %s9, %s7
  %12 = dma.hbm_to_smem %s0, 16, [#allocation3], [#allocation2]
  %s13 = sshll.u32 %s1, 4
  %s14 = int_to_ptr.vmem [resolvable:$true] %s13
  %16 = dma.vmem_to_smem %s14, 16, [#allocation4], [#allocation2]
  %s17 = sshll.u32 %s2, 4
  %s18 = int_to_ptr.vmem [resolvable:$true] %s17
  %20 = dma.vmem_to_smem %s18, 16, [#allocation5], [#allocation2]
  %21 = dma.done [#allocation2], 48
  %22 = sfence
  $region1: #{tpu_custom_call.1} parent=0
    #allocation6 [shape = 'u8[53248]{0}', space=vmem, size = 0xd000, scoped, tag = 'input window, operand 3, single buffered']
    #allocation7 [shape = 's32[1]{0}', space=sflag, size = 0x4, scoped, tag = 'scoped memory for tpu_custom_call.1']
    #allocation8 [shape = 's32[1]{0}', space=sflag, size = 0x4, scoped, tag = 'scoped memory for tpu_custom_call.1']
    #allocation9 [shape = 'u8[16384]{0}', space=vmem, size = 0x4000, scoped, tag = 'input window, operand 4, single buffered']
    #allocation10 [shape = 's32[1]{0}', space=sflag, size = 0x4, scoped, tag = 'scoped memory for tpu_custom_call.1']
    #allocation11 [shape = 'u8[16384]{0}', space=vmem, size = 0x4000, scoped, tag = 'input window, operand 5, single buffered']
    #allocation12 [shape = 'u8[65536]{0}', space=vmem, size = 0x10000, scoped, tag = 'output window, operand 0, single buffered']
    %23 = vsyncpa [#allocation7], 0
    %24 = vsyncpa [#allocation10], 0
    %25 = vsyncpa [#allocation8], 0
    // Predicated region
    $region2: #{tpu_custom_call.1} parent=1 // pred_check
      _
    $region3: #{tpu_custom_call.1} parent=1 // pred_check_branch
      %27 = sbr.rel (0) target = $region5
    $region4: #{tpu_custom_call.1} parent=1 // pred_region
      %s29 = ssub.s32 1664, 1664
      %30 = vsyncadd [#allocation7], %s29
      %s31 = sshll.u32 [#allocation6], 4
      %s32 = int_to_ptr.vmem [resolvable:$true] %s31
      %37 = dma.hbm_to_vmem [thread:$0]  %s3, 1664, %s32, [#allocation7], 128, 128, 8
    $region5: #{tpu_custom_call.1} parent=1 // pred_fallthru
      _
    // Predicated region
    $region6: #{tpu_custom_call.1} parent=1 // pred_check
      _
    $region7: #{tpu_custom_call.1} parent=1 // pred_check_branch
      %39 = sbr.rel (0) target = $region9
    $region8: #{tpu_custom_call.1} parent=1 // pred_region
      %s41 = ssub.s32 512, 512
      %42 = vsyncadd [#allocation10], %s41
      %s43 = sshll.u32 [#allocation9], 4
      %s44 = int_to_ptr.vmem [resolvable:$true] %s43
      %49 = dma.hbm_to_vmem [thread:$0]  %s4, 512, %s44, [#allocation10], 128, 128, 8
    $region9: #{tpu_custom_call.1} parent=1 // pred_fallthru
      _
    // Predicated region
    $region10: #{tpu_custom_call.1} parent=1 // pred_check
      _
    $region11: #{tpu_custom_call.1} parent=1 // pred_check_branch
      %51 = sbr.rel (0) target = $region13
    $region12: #{tpu_custom_call.1} parent=1 // pred_region
      %s53 = ssub.s32 512, 512
      %54 = vsyncadd [#allocation10], %s53
      %s55 = sshll.u32 [#allocation11], 4
      %s56 = int_to_ptr.vmem [resolvable:$true] %s55
      %61 = dma.hbm_to_vmem [thread:$0]  %s5, 512, %s56, [#allocation10], 128, 128, 8
    $region13: #{tpu_custom_call.1} parent=1 // pred_fallthru
      _
    // Predicated region
    $region14: #{tpu_custom_call.1} parent=1 // pred_check
      _
    $region15: #{tpu_custom_call.1} parent=1 // pred_check_branch
      %63 = sbr.rel (0) target = $region17
    $region16: #{tpu_custom_call.1} parent=1 // pred_region
      %64 = dma.done [#allocation7], 1664
    $region17: #{tpu_custom_call.1} parent=1 // pred_fallthru
      _
    // Predicated region
    $region18: #{tpu_custom_call.1} parent=1 // pred_check
      _
    $region19: #{tpu_custom_call.1} parent=1 // pred_check_branch
      %66 = sbr.rel (0) target = $region21
    $region20: #{tpu_custom_call.1} parent=1 // pred_region
      %67 = dma.done [#allocation10], 512
    $region21: #{tpu_custom_call.1} parent=1 // pred_fallthru
      _
    // Predicated region
    $region22: #{tpu_custom_call.1} parent=1 // pred_check
      _
    $region23: #{tpu_custom_call.1} parent=1 // pred_check_branch
      %69 = sbr.rel (0) target = $region25
    $region24: #{tpu_custom_call.1} parent=1 // pred_region
      %70 = dma.done [#allocation10], 512
    $region25: #{tpu_custom_call.1} parent=1 // pred_fallthru
      _
    %s71 = smul.u32 0, 128
    loop: start=0, step=1, limit=16
    $region26: #{tpu_custom_call.1} parent=1 // loop_pre_header
      _
    $region27: #{tpu_custom_call.1} parent=1 // loop_header
      %s73 = sphi 0, %s77
      %p74 = scmp.ge.s32.totalorder %s73, 16
    $region28: #{tpu_custom_call.1} parent=1 // loop_header_branch
      %76 = sbr.rel (%p74) target = $region32
    $region29: #{tpu_custom_call.1} parent=1 // loop_body
      %s78 = smul.u32 %s73, 8
      %s79 = sadd.s32 %s71, %s78
      %s80 = sld [smem:[#allocation3 + %s79]]
      %s81 = scalar_lea.vmem [#allocation6], %s80
      %v82 = vld [vmem:[%s81] sm:$0x1]
      %s83 = sld [smem:[#allocation4 + %s79]]
      %s84 = scalar_lea.vmem [#allocation9], %s83
      %v85 = vld [vmem:[%s84] sm:$0x1]
      %v86 = vadd.f32 %v82, %v85
      %s87 = sld [smem:[#allocation5 + %s79]]
      %s88 = scalar_lea.vmem [#allocation11], %s87
      %v89 = vld [vmem:[%s88] sm:$0x1]
      %v90 = vadd.f32 %v86, %v89
      %s91 = scalar_lea.vmem [#allocation12], %s78
      %92 = vst [vmem:[%s91] sm:$0x1] %v90
      %s93 = sadd.s32 %s78, 1
      %s94 = sadd.s32 %s71, %s93
      %s95 = sld [smem:[#allocation3 + %s94]]
      %s96 = scalar_lea.vmem [#allocation6], %s95
      %v97 = vld [vmem:[%s96] sm:$0x1]
      %s98 = sld [smem:[#allocation4 + %s94]]
      %s99 = scalar_lea.vmem [#allocation9], %s98
      %v100 = vld [vmem:[%s99] sm:$0x1]
      %v101 = vadd.f32 %v97, %v100
      %s102 = sld [smem:[#allocation5 + %s94]]
      %s103 = scalar_lea.vmem [#allocation11], %s102
      %v104 = vld [vmem:[%s103] sm:$0x1]
      %v105 = vadd.f32 %v101, %v104
      %s106 = scalar_lea.vmem [#allocation12], %s93
      %107 = vst [vmem:[%s106] sm:$0x1] %v105
      %s108 = sadd.s32 %s78, 2
      %s109 = sadd.s32 %s71, %s108
      %s110 = sld [smem:[#allocation3 + %s109]]
      %s111 = scalar_lea.vmem [#allocation6], %s110
      %v112 = vld [vmem:[%s111] sm:$0x1]
      %s113 = sld [smem:[#allocation4 + %s109]]
      %s114 = scalar_lea.vmem [#allocation9], %s113
      %v115 = vld [vmem:[%s114] sm:$0x1]
      %v116 = vadd.f32 %v112, %v115
      %s117 = sld [smem:[#allocation5 + %s109]]
      %s118 = scalar_lea.vmem [#allocation11], %s117
      %v119 = vld [vmem:[%s118] sm:$0x1]
      %v120 = vadd.f32 %v116, %v119
      %s121 = scalar_lea.vmem [#allocation12], %s108
      %122 = vst [vmem:[%s121] sm:$0x1] %v120
      %s123 = sadd.s32 %s78, 3
      %s124 = sadd.s32 %s71, %s123
      %s125 = sld [smem:[#allocation3 + %s124]]
      %s126 = scalar_lea.vmem [#allocation6], %s125
      %v127 = vld [vmem:[%s126] sm:$0x1]
      %s128 = sld [smem:[#allocation4 + %s124]]
      %s129 = scalar_lea.vmem [#allocation9], %s128
      %v130 = vld [vmem:[%s129] sm:$0x1]
      %v131 = vadd.f32 %v127, %v130
      %s132 = sld [smem:[#allocation5 + %s124]]
      %s133 = scalar_lea.vmem [#allocation11], %s132
      %v134 = vld [vmem:[%s133] sm:$0x1]
      %v135 = vadd.f32 %v131, %v134
      %s136 = scalar_lea.vmem [#allocation12], %s123
      %137 = vst [vmem:[%s136] sm:$0x1] %v135
      %s138 = sadd.s32 %s78, 4
      %s139 = sadd.s32 %s71, %s138
      %s140 = sld [smem:[#allocation3 + %s139]]
      %s141 = scalar_lea.vmem [#allocation6], %s140
      %v142 = vld [vmem:[%s141] sm:$0x1]
      %s143 = sld [smem:[#allocation4 + %s139]]
      %s144 = scalar_lea.vmem [#allocation9], %s143
      %v145 = vld [vmem:[%s144] sm:$0x1]
      %v146 = vadd.f32 %v142, %v145
      %s147 = sld [smem:[#allocation5 + %s139]]
      %s148 = scalar_lea.vmem [#allocation11], %s147
      %v149 = vld [vmem:[%s148] sm:$0x1]
      %v150 = vadd.f32 %v146, %v149
      %s151 = scalar_lea.vmem [#allocation12], %s138
      %152 = vst [vmem:[%s151] sm:$0x1] %v150
      %s153 = sadd.s32 %s78, 5
      %s154 = sadd.s32 %s71, %s153
      %s155 = sld [smem:[#allocation3 + %s154]]
      %s156 = scalar_lea.vmem [#allocation6], %s155
      %v157 = vld [vmem:[%s156] sm:$0x1]
      %s158 = sld [smem:[#allocation4 + %s154]]
      %s159 = scalar_lea.vmem [#allocation9], %s158
      %v160 = vld [vmem:[%s159] sm:$0x1]
      %v161 = vadd.f32 %v157, %v160
      %s162 = sld [smem:[#allocation5 + %s154]]
      %s163 = scalar_lea.vmem [#allocation11], %s162
      %v164 = vld [vmem:[%s163] sm:$0x1]
      %v165 = vadd.f32 %v161, %v164
      %s166 = scalar_lea.vmem [#allocation12], %s153
      %167 = vst [vmem:[%s166] sm:$0x1] %v165
      %s168 = sadd.s32 %s78, 6
      %s169 = sadd.s32 %s71, %s168
      %s170 = sld [smem:[#allocation3 + %s169]]
      %s171 = scalar_lea.vmem [#allocation6], %s170
      %v172 = vld [vmem:[%s171] sm:$0x1]
      %s173 = sld [smem:[#allocation4 + %s169]]
      %s174 = scalar_lea.vmem [#allocation9], %s173
      %v175 = vld [vmem:[%s174] sm:$0x1]
      %v176 = vadd.f32 %v172, %v175
      %s177 = sld [smem:[#allocation5 + %s169]]
      %s178 = scalar_lea.vmem [#allocation11], %s177
      %v179 = vld [vmem:[%s178] sm:$0x1]
      %v180 = vadd.f32 %v176, %v179
      %s181 = scalar_lea.vmem [#allocation12], %s168
      %182 = vst [vmem:[%s181] sm:$0x1] %v180
      %s183 = sadd.s32 %s78, 7
      %s184 = sadd.s32 %s71, %s183
      %s185 = sld [smem:[#allocation3 + %s184]]
      %s186 = scalar_lea.vmem [#allocation6], %s185
      %v187 = vld [vmem:[%s186] sm:$0x1]
      %s188 = sld [smem:[#allocation4 + %s184]]
      %s189 = scalar_lea.vmem [#allocation9], %s188
      %v190 = vld [vmem:[%s189] sm:$0x1]
      %v191 = vadd.f32 %v187, %v190
      %s192 = sld [smem:[#allocation5 + %s184]]
      %s193 = scalar_lea.vmem [#allocation11], %s192
      %v194 = vld [vmem:[%s193] sm:$0x1]
      %v195 = vadd.f32 %v191, %v194
      %s196 = scalar_lea.vmem [#allocation12], %s183
      %197 = vst [vmem:[%s196] sm:$0x1] %v195
    $region30: #{tpu_custom_call.1} parent=1 // loop_footer
      %s77 = sadd.s32 1, %s73
    $region31: #{tpu_custom_call.1} parent=1 // loop_footer_branch
      %72 = sbr.rel target = $region27
    $region32: #{tpu_custom_call.1} parent=1 // loop_exit
      _
    // Predicated region
    $region33: #{tpu_custom_call.1} parent=1 // pred_check
      _
    $region34: #{tpu_custom_call.1} parent=1 // pred_check_branch
      %199 = sbr.rel (0) target = $region36
    $region35: #{tpu_custom_call.1} parent=1 // pred_region
      %s201 = ssub.s32 2048, 2048
      %202 = vsyncadd [#allocation8], %s201
      %s203 = sshll.u32 [#allocation12], 4
      %s204 = int_to_ptr.vmem [resolvable:$true] %s203
      %209 = dma.vmem_to_hbm [thread:$0]  %s204, 2048, %s6, [#allocation8], 128, 128, 8
    $region36: #{tpu_custom_call.1} parent=1 // pred_fallthru
      _
    // Predicated region
    $region37: #{tpu_custom_call.1} parent=1 // pred_check
      _
    $region38: #{tpu_custom_call.1} parent=1 // pred_check_branch
      %211 = sbr.rel (0) target = $region40
    $region39: #{tpu_custom_call.1} parent=1 // pred_region
      %212 = dma.done [#allocation8], 2048
    $region40: #{tpu_custom_call.1} parent=1 // pred_fallthru
      _
    %213 = vsyncpa [#allocation7], 1
    %214 = vsyncpa [#allocation10], 1
    %215 = vsyncpa [#allocation8], 1

</llo_original>
